<compile_context>
chip_gen: v7x
topology: tpu7x:2x2x1
jax: 0.10.0
libtpu: 0.0.40
codegen_flags: <defaults>
</compile_context>

<pallas_src>
import jax
import jax.numpy as jnp
from jax.experimental import pallas as pl
from jax.experimental.pallas import tpu as pltpu


def _relu_kernel(x_ref, o_ref):
    # Elementwise max(x, 0) on the whole VMEM tile (single VPU pass).
    o_ref[...] = jnp.maximum(x_ref[...], jnp.zeros((), x_ref.dtype))


def _round_up(v: int, m: int) -> int:
    return ((v + m - 1) // m) * m


@jax.jit
def relu_pallas(x: jax.Array) -> jax.Array:
    """ReLU over an arbitrary-shaped array via a tiled Pallas TPU kernel."""
    orig_shape = x.shape
    dtype = x.dtype
    n = x.size
    itemsize = jnp.dtype(dtype).itemsize

    LANE = 128
    # Sublane multiple depends on packing: 8 for 32-bit, 16 for 16-bit, 32 for 8-bit.
    sub = max(8, 32 // itemsize)

    x_flat = x.reshape(-1)
    padded = False
    if n % LANE != 0:
        # Rare fallback (odd flat length): minimal pad to a lane-friendly width.
        n_pad = _round_up(n, sub * LANE)
        x_flat = jnp.pad(x_flat, (0, n_pad - n))
        padded = True
    else:
        n_pad = n

    # Widest lane-dense width that divides the flat length exactly.
    W = LANE
    for cand in (4096, 2048, 1024, 512, 256):
        if n_pad % cand == 0:
            W = cand
            break
    rows = n_pad // W

    # ~2 MiB tiles: with input+output double-buffered that is ~8 MiB of VMEM,
    # safely under the default scoped limit on v5e/v6e/v7x.
    target_bytes = 2 * 1024 * 1024
    if rows <= sub:
        # Tiny input: a single full-extent block (block dim == array dim is legal).
        tr = rows
    else:
        max_tr = max(sub, (target_bytes // (W * itemsize)) // sub * sub)
        tr = min(max_tr, _round_up(rows, sub))
        # Keep >= 2 grid steps so v7x's two TensorCores both get work.
        if pl.cdiv(rows, tr) < 2:
            tr = max(sub, _round_up(pl.cdiv(rows, 2), sub))

    grid = (pl.cdiv(rows, tr),)

    cost = pl.CostEstimate(
        flops=n,
        transcendentals=0,
        bytes_accessed=2 * n * itemsize,
    )

    y2d = pl.pallas_call(
        _relu_kernel,
        out_shape=jax.ShapeDtypeStruct((rows, W), dtype),
        grid_spec=pltpu.PrefetchScalarGridSpec(
            num_scalar_prefetch=0,
            grid=grid,
            in_specs=[pl.BlockSpec((tr, W), lambda i: (i, 0))],
            out_specs=pl.BlockSpec((tr, W), lambda i: (i, 0)),
        ),
        compiler_params=pltpu.CompilerParams(
            dimension_semantics=("parallel",),
        ),
        cost_estimate=cost,
    )(x_flat.reshape(rows, W))

    y_flat = y2d.reshape(-1)
    if padded:
        y_flat = y_flat[:n]
    return y_flat.reshape(orig_shape)


if __name__ == "__main__":
    key = jax.random.PRNGKey(0)

    # NCHW input, same convention as the PyTorch module's conv-style activations.
    x = jax.random.normal(key, (2, 4, 16, 16), dtype=jnp.float32)
    y = jax.block_until_ready(relu_pallas(x))
    y_ref = jnp.maximum(x, 0.0)
    assert y.shape == x.shape and y.dtype == x.dtype
    assert jnp.allclose(y, y_ref), "mismatch vs reference ReLU (fp32)"

    # bf16 path (exercises dtype-aware sublane multiple).
    xb = jax.random.normal(jax.random.PRNGKey(1), (2, 4, 16, 16),
                           dtype=jnp.bfloat16)
    yb = jax.block_until_ready(relu_pallas(xb))
    assert yb.dtype == jnp.bfloat16
    assert jnp.array_equal(yb, jnp.maximum(xb, jnp.bfloat16(0))), \
        "mismatch vs reference ReLU (bf16)"

    # Odd flat length (exercises the minimal-pad fallback path).
    xo = jax.random.normal(jax.random.PRNGKey(2), (3, 5, 7), dtype=jnp.float32)
    yo = jax.block_until_ready(relu_pallas(xo))
    assert jnp.allclose(yo, jnp.maximum(xo, 0.0)), "mismatch vs reference ReLU (odd)"

    print("KERNEL_OK")
</pallas_src>

<mosaic_0001>
module attributes {stable_mosaic.version = 11 : i64} {
  func.func @_relu_kernel(%arg0: i32, %arg1: memref<1x2048xf32, #tpu.memory_space<vmem>>, %arg2: memref<1x2048xf32, #tpu.memory_space<vmem>>) attributes {dimension_semantics = [#tpu.dimension_semantics<parallel>], iteration_bounds = array<i64: 1>, scalar_prefetch = 0 : i64, scratch_operands = 0 : i64, tpu.core_type = #tpu.core_type<tc>, window_params = [{transform_indices = @transform_0, window_bounds = array<i64: 1, 2048>}, {transform_indices = @transform_1, window_bounds = array<i64: 1, 2048>}]} {
    %c0 = arith.constant 0 : index
    %c0_0 = arith.constant 0 : index
    %0 = vector.load %arg1[%c0, %c0_0] : memref<1x2048xf32, #tpu.memory_space<vmem>>, vector<1x2048xf32>
    %cst = arith.constant 0.000000e+00 : f32
    %1 = vector.broadcast %cst : f32 to vector<1x2048xf32>
    %2 = arith.maximumf %0, %1 : vector<1x2048xf32>
    %c0_1 = arith.constant 0 : index
    %c0_2 = arith.constant 0 : index
    %3 = vector.load %arg2[%c0_1, %c0_2] : memref<1x2048xf32, #tpu.memory_space<vmem>>, vector<1x2048xf32>
    tpu.vector_store %arg2[%c0_1, %c0_2], %2 {strides = array<i32>} : memref<1x2048xf32, #tpu.memory_space<vmem>>, vector<1x2048xf32>,
    return
  }
  func.func @transform_0(%arg0: i32) -> (i32, i32) {
    %c0_i32 = arith.constant 0 : i32
    %c0_i32_0 = arith.constant 0 : i32
    return %arg0, %c0_i32 : i32, i32
  }
  func.func @transform_1(%arg0: i32) -> (i32, i32) {
    %c0_i32 = arith.constant 0 : i32
    %c0_i32_0 = arith.constant 0 : i32
    return %arg0, %c0_i32 : i32, i32
  }
}

</mosaic_0001>

<llo_original>
// kernel: relu_pallas.1
$region0: #{relu_pallas.1}
  #allocation0 [shape = 'u32[]', space=smem, size = 0x4, offset = 0x4, fixed_abs, tag = 'smem constant byte address 0x4 - core index']
  #allocation1 [shape = 'u32[144,128]{1,0:T(1,128)}', space=vmem, size = 0x12000, scoped, tag = 'internal scratch']
  %s0 = inlined_call_operand.vmem [shape: f32[1,2048], index: 0, kind: input, shape index: {}]
  %s1 = inlined_call_operand.vmem [shape: f32[1,2048], index: 1, kind: output, shape index: {}]
  %s2 = sld [smem:[#allocation0]]
  $region14: #{relu_pallas.1} parent=0
    _
  %s4 = ssub.s32 1, %s2
  %s5 = scalar_select 0, %s4, %s2
  // Predicated region
  $region2: #{relu_pallas.1} parent=0 // pred_check
    _
  $region3: #{relu_pallas.1} parent=0 // pred_check_branch
    %7 = sbr.rel (0) target = $region5
  $region4: #{relu_pallas.1} parent=0 // pred_region
    _
  $region5: #{relu_pallas.1} parent=0 // pred_fallthru
    _
  %v8 = vld [vmem:[%s0] sm:$0xff]
  %v9 = vld [vmem:[%s0 + $0x8] sm:$0xff]
  %v10 = vmax.f32 %v8, 0.0
  %v11 = vmax.f32 %v9, 0.0
  %12 = vst [vmem:[%s1] sm:$0xff] %v10
  %13 = vst [vmem:[%s1 + $0x8] sm:$0xff] %v11
  // Predicated region
  $region6: #{relu_pallas.1} parent=0 // pred_check
    _
  $region7: #{relu_pallas.1} parent=0 // pred_check_branch
    %15 = sbr.rel (0) target = $region9
  $region8: #{relu_pallas.1} parent=0 // pred_region
    _
  $region9: #{relu_pallas.1} parent=0 // pred_fallthru
    _
  // Predicated region
  $region10: #{relu_pallas.1} parent=0 // pred_check
    _
  $region11: #{relu_pallas.1} parent=0 // pred_check_branch
    %17 = sbr.rel (0) target = $region13
  $region12: #{relu_pallas.1} parent=0 // pred_region
    _
  $region13: #{relu_pallas.1} parent=0 // pred_fallthru
    _

</llo_original>
